<compile_context>
chip_gen: v7x
topology: tpu7x:2x2x1
jax: 0.10.0
libtpu: 0.0.40
codegen_flags: <defaults>
</compile_context>

<pallas_src>
import functools

import jax
import jax.numpy as jnp
from jax.experimental import pallas as pl
from jax.experimental.pallas import tpu as pltpu

_LANE = 128      # vreg lane width (last dim)
_SUBLANE = 8     # vreg sublane count (second-to-last dim)


def _round_up(n, m):
    return ((n + m - 1) // m) * m


def _dqn_kernel(x_ref, w1_ref, b1_ref, w2_ref, b2_ref, w3_ref, b3_ref, o_ref):
    # x_ref : [tb, in_dim]  f32 batch tile (streamed over the grid)
    # w*    : bf16 weights, resident in VMEM (constant index_map)
    # b*    : f32 bias rows [1, n], resident in VMEM
    # o_ref : [tb, out_dim] f32 (unpadded, written directly)
    x = x_ref[...].astype(jnp.bfloat16)                    # cheap VPU cast -> bf16 MXU inputs
    h1 = jnp.dot(x, w1_ref[...], preferred_element_type=jnp.float32) + b1_ref[...]
    h1 = jnp.maximum(h1, 0.0)                              # f32 ReLU on the VPU
    h2 = jnp.dot(h1.astype(jnp.bfloat16), w2_ref[...],
                 preferred_element_type=jnp.float32) + b2_ref[...]
    h2 = jnp.maximum(h2, 0.0)
    o_ref[...] = jnp.dot(h2.astype(jnp.bfloat16), w3_ref[...],
                         preferred_element_type=jnp.float32) + b3_ref[...]


def prepare_params(w1, b1, w2, b2, w3, b3):
    """One-time weight prep, hoisted out of the per-call path.

    Pads the hidden dim up to a multiple of 128 lanes (no-op for hidden=128),
    casts weight matrices to bf16 for the MXU, keeps biases as f32 [1, n] rows.
    Input/output feature dims stay unpadded (blocks use the full array dim).
    """
    in_dim, hidden = w1.shape
    out_dim = w3.shape[1]
    hid_p = _round_up(hidden, _LANE)

    bf16, f32 = jnp.bfloat16, jnp.float32
    w1p = jnp.zeros((in_dim, hid_p), bf16).at[:, :hidden].set(w1.astype(bf16))
    b1p = jnp.zeros((1, hid_p), f32).at[:, :hidden].set(b1.reshape(1, -1).astype(f32))
    w2p = jnp.zeros((hid_p, hid_p), bf16).at[:hidden, :hidden].set(w2.astype(bf16))
    b2p = jnp.zeros((1, hid_p), f32).at[:, :hidden].set(b2.reshape(1, -1).astype(f32))
    w3p = jnp.zeros((hid_p, out_dim), bf16).at[:hidden, :].set(w3.astype(bf16))
    b3p = b3.reshape(1, out_dim).astype(f32)
    return w1p, b1p, w2p, b2p, w3p, b3p


def _choose_batch_tile(batch, block_b):
    block_b = _round_up(max(block_b, _SUBLANE), _SUBLANE)   # defensive (8,128) rule
    if batch <= 256:
        return batch                 # single tile; tb == full array dim is always legal
    if batch <= 2 * block_b:
        # Guarantee >= 2 grid steps so ("parallel",) engages both v7x TensorCores.
        return _round_up(pl.cdiv(batch, 2), _SUBLANE)
    return block_b


@functools.partial(jax.jit, static_argnames=("block_b",))
def dqn_forward(x, w1p, b1p, w2p, b2p, w3p, b3p, block_b=1024):
    batch, in_dim = x.shape
    hid_p = w1p.shape[1]
    out_dim = w3p.shape[1]

    tb = _choose_batch_tile(batch, block_b)
    grid = (pl.cdiv(batch, tb),)     # partial last tile OK: rows are independent

    def resident(shape):
        # Same block every grid step -> stays loaded in VMEM across the whole grid.
        return pl.BlockSpec(shape, lambda i: (0, 0))

    cost = pl.CostEstimate(
        flops=2 * batch * (in_dim * hid_p + hid_p * hid_p + hid_p * out_dim),
        transcendentals=0,
        bytes_accessed=(
            x.size * x.dtype.itemsize
            + sum(a.size * a.dtype.itemsize for a in (w1p, b1p, w2p, b2p, w3p, b3p))
            + batch * out_dim * 4
        ),
    )

    return pl.pallas_call(
        _dqn_kernel,
        out_shape=jax.ShapeDtypeStruct((batch, out_dim), jnp.float32),
        grid=grid,
        in_specs=[
            pl.BlockSpec((tb, in_dim), lambda i: (i, 0)),   # x: unpadded, streamed over batch
            resident((in_dim, hid_p)),                      # w1 (bf16)
            resident((1, hid_p)),                           # b1 (f32)
            resident((hid_p, hid_p)),                       # w2 (bf16)
            resident((1, hid_p)),                           # b2 (f32)
            resident((hid_p, out_dim)),                     # w3 (bf16)
            resident((1, out_dim)),                         # b3 (f32)
        ],
        out_specs=pl.BlockSpec((tb, out_dim), lambda i: (i, 0)),   # unpadded output
        compiler_params=pltpu.CompilerParams(
            dimension_semantics=("parallel",),              # shard batch tiles across TCs (v7x)
        ),
        cost_estimate=cost,
    )(x, w1p, b1p, w2p, b2p, w3p, b3p)


def init_dqn_params(key, input_dim, output_dim, hidden_size=128):
    """Deterministic init mimicking nn.Linear's U(-1/sqrt(fan_in), 1/sqrt(fan_in)).

    Weights stored as [in_features, out_features] (transposed vs PyTorch),
    biases as [1, out_features] rows.
    """
    keys = jax.random.split(key, 6)

    def linear(kw, kb, fan_in, fan_out):
        bound = 1.0 / jnp.sqrt(jnp.float32(fan_in))
        w = jax.random.uniform(kw, (fan_in, fan_out), jnp.float32, -bound, bound)
        b = jax.random.uniform(kb, (1, fan_out), jnp.float32, -bound, bound)
        return w, b

    w1, b1 = linear(keys[0], keys[1], input_dim, hidden_size)
    w2, b2 = linear(keys[2], keys[3], hidden_size, hidden_size)
    w3, b3 = linear(keys[4], keys[5], hidden_size, output_dim)
    return w1, b1, w2, b2, w3, b3


def dqn_reference(x, w1, b1, w2, b2, w3, b3):
    h1 = jnp.maximum(x @ w1 + b1, 0.0)
    h2 = jnp.maximum(h1 @ w2 + b2, 0.0)
    return h2 @ w3 + b3


if __name__ == "__main__":
    key = jax.random.PRNGKey(0)
    k_x, k_p = jax.random.split(key)

    batch = 8
    input_dim = 16       # small state vector
    output_dim = 4       # 4 discrete actions
    hidden_size = 128    # DQN default

    x = jax.random.normal(k_x, (batch, input_dim), jnp.float32)
    raw_params = init_dqn_params(k_p, input_dim, output_dim, hidden_size)
    params = prepare_params(*raw_params)     # pad + bf16-cast once, outside the call path

    out = jax.block_until_ready(dqn_forward(x, *params))
    ref = dqn_reference(x, *raw_params)

    assert out.shape == (batch, output_dim)
    assert out.dtype == jnp.float32
    # bf16 MXU inputs (f32 accumulate) -> tolerance loosened vs the exact f32 reference.
    assert jnp.allclose(out, ref, atol=5e-2, rtol=5e-2), float(jnp.max(jnp.abs(out - ref)))

    print("KERNEL_OK")
</pallas_src>

<mosaic_0001>
module attributes {stable_mosaic.version = 11 : i64} {
  func.func @_dqn_kernel(%arg0: i32, %arg1: memref<8x16xf32, #tpu.memory_space<vmem>>, %arg2: memref<16x128xbf16, #tpu.memory_space<vmem>>, %arg3: memref<1x128xf32, #tpu.memory_space<vmem>>, %arg4: memref<128x128xbf16, #tpu.memory_space<vmem>>, %arg5: memref<1x128xf32, #tpu.memory_space<vmem>>, %arg6: memref<128x4xbf16, #tpu.memory_space<vmem>>, %arg7: memref<1x4xf32, #tpu.memory_space<vmem>>, %arg8: memref<8x4xf32, #tpu.memory_space<vmem>>) attributes {dimension_semantics = [#tpu.dimension_semantics<parallel>], iteration_bounds = array<i64: 1>, scalar_prefetch = 0 : i64, scratch_operands = 0 : i64, tpu.core_type = #tpu.core_type<tc>, window_params = [{transform_indices = @transform_0, window_bounds = array<i64: 8, 16>}, {pipeline_mode = #tpu.pipeline_mode<synchronous>, transform_indices = @transform_1, window_bounds = array<i64: 16, 128>}, {pipeline_mode = #tpu.pipeline_mode<synchronous>, transform_indices = @transform_2, window_bounds = array<i64: 1, 128>}, {pipeline_mode = #tpu.pipeline_mode<synchronous>, transform_indices = @transform_3, window_bounds = array<i64: 128, 128>}, {pipeline_mode = #tpu.pipeline_mode<synchronous>, transform_indices = @transform_4, window_bounds = array<i64: 1, 128>}, {pipeline_mode = #tpu.pipeline_mode<synchronous>, transform_indices = @transform_5, window_bounds = array<i64: 128, 4>}, {pipeline_mode = #tpu.pipeline_mode<synchronous>, transform_indices = @transform_6, window_bounds = array<i64: 1, 4>}, {transform_indices = @transform_7, window_bounds = array<i64: 8, 4>}]} {
    %c0 = arith.constant 0 : index
    %c0_0 = arith.constant 0 : index
    %0 = vector.load %arg1[%c0, %c0_0] : memref<8x16xf32, #tpu.memory_space<vmem>>, vector<8x16xf32>
    %1 = arith.truncf %0 : vector<8x16xf32> to vector<8x16xbf16>
    %c0_1 = arith.constant 0 : index
    %c0_2 = arith.constant 0 : index
    %2 = vector.load %arg2[%c0_1, %c0_2] : memref<16x128xbf16, #tpu.memory_space<vmem>>, vector<16x128xbf16>
    %cst = arith.constant dense<0.000000e+00> : vector<8x128xf32>
    %3 = tpu.matmul %1, %2, %cst {dimension_numbers = #tpu.dot_dimension_numbers<[1], [0], [0], [1], [0, 0, 1, 1], [], []>} : vector<8x16xbf16>, vector<16x128xbf16>, vector<8x128xf32> -> vector<8x128xf32>
    %c0_3 = arith.constant 0 : index
    %c0_4 = arith.constant 0 : index
    %4 = vector.load %arg3[%c0_3, %c0_4] : memref<1x128xf32, #tpu.memory_space<vmem>>, vector<1x128xf32>
    %5 = vector.broadcast %4 : vector<1x128xf32> to vector<8x128xf32>
    %6 = arith.addf %3, %5 : vector<8x128xf32>
    %cst_5 = arith.constant 0.000000e+00 : f32
    %7 = vector.broadcast %cst_5 : f32 to vector<8x128xf32>
    %8 = arith.maximumf %6, %7 : vector<8x128xf32>
    %9 = arith.truncf %8 : vector<8x128xf32> to vector<8x128xbf16>
    %c0_6 = arith.constant 0 : index
    %c0_7 = arith.constant 0 : index
    %10 = vector.load %arg4[%c0_6, %c0_7] : memref<128x128xbf16, #tpu.memory_space<vmem>>, vector<128x128xbf16>
    %cst_8 = arith.constant dense<0.000000e+00> : vector<8x128xf32>
    %11 = tpu.matmul %9, %10, %cst_8 {dimension_numbers = #tpu.dot_dimension_numbers<[1], [0], [0], [1], [0, 0, 1, 1], [], []>} : vector<8x128xbf16>, vector<128x128xbf16>, vector<8x128xf32> -> vector<8x128xf32>
    %c0_9 = arith.constant 0 : index
    %c0_10 = arith.constant 0 : index
    %12 = vector.load %arg5[%c0_9, %c0_10] : memref<1x128xf32, #tpu.memory_space<vmem>>, vector<1x128xf32>
    %13 = vector.broadcast %12 : vector<1x128xf32> to vector<8x128xf32>
    %14 = arith.addf %11, %13 : vector<8x128xf32>
    %cst_11 = arith.constant 0.000000e+00 : f32
    %15 = vector.broadcast %cst_11 : f32 to vector<8x128xf32>
    %16 = arith.maximumf %14, %15 : vector<8x128xf32>
    %17 = arith.truncf %16 : vector<8x128xf32> to vector<8x128xbf16>
    %c0_12 = arith.constant 0 : index
    %c0_13 = arith.constant 0 : index
    %18 = vector.load %arg6[%c0_12, %c0_13] : memref<128x4xbf16, #tpu.memory_space<vmem>>, vector<128x4xbf16>
    %cst_14 = arith.constant dense<0.000000e+00> : vector<8x4xf32>
    %19 = tpu.matmul %17, %18, %cst_14 {dimension_numbers = #tpu.dot_dimension_numbers<[1], [0], [0], [1], [0, 0, 1, 1], [], []>} : vector<8x128xbf16>, vector<128x4xbf16>, vector<8x4xf32> -> vector<8x4xf32>
    %c0_15 = arith.constant 0 : index
    %c0_16 = arith.constant 0 : index
    %20 = vector.load %arg7[%c0_15, %c0_16] : memref<1x4xf32, #tpu.memory_space<vmem>>, vector<1x4xf32>
    %21 = vector.broadcast %20 : vector<1x4xf32> to vector<8x4xf32>
    %22 = arith.addf %19, %21 : vector<8x4xf32>
    %c0_17 = arith.constant 0 : index
    %c0_18 = arith.constant 0 : index
    %23 = vector.load %arg8[%c0_17, %c0_18] : memref<8x4xf32, #tpu.memory_space<vmem>>, vector<8x4xf32>
    tpu.vector_store %arg8[%c0_17, %c0_18], %22 {strides = array<i32>} : memref<8x4xf32, #tpu.memory_space<vmem>>, vector<8x4xf32>,
    return
  }
  func.func @transform_0(%arg0: i32) -> (i32, i32) {
    %c0_i32 = arith.constant 0 : i32
    %c0_i32_0 = arith.constant 0 : i32
    return %arg0, %c0_i32 : i32, i32
  }
  func.func @transform_1(%arg0: i32) -> (i32, i32) {
    %c0_i32 = arith.constant 0 : i32
    %c0_i32_0 = arith.constant 0 : i32
    %c0_i32_1 = arith.constant 0 : i32
    return %c0_i32, %c0_i32_0 : i32, i32
  }
  func.func @transform_2(%arg0: i32) -> (i32, i32) {
    %c0_i32 = arith.constant 0 : i32
    %c0_i32_0 = arith.constant 0 : i32
    %c0_i32_1 = arith.constant 0 : i32
    return %c0_i32, %c0_i32_0 : i32, i32
  }
  func.func @transform_3(%arg0: i32) -> (i32, i32) {
    %c0_i32 = arith.constant 0 : i32
    %c0_i32_0 = arith.constant 0 : i32
    %c0_i32_1 = arith.constant 0 : i32
    return %c0_i32, %c0_i32_0 : i32, i32
  }
  func.func @transform_4(%arg0: i32) -> (i32, i32) {
    %c0_i32 = arith.constant 0 : i32
    %c0_i32_0 = arith.constant 0 : i32
    %c0_i32_1 = arith.constant 0 : i32
    return %c0_i32, %c0_i32_0 : i32, i32
  }
  func.func @transform_5(%arg0: i32) -> (i32, i32) {
    %c0_i32 = arith.constant 0 : i32
    %c0_i32_0 = arith.constant 0 : i32
    %c0_i32_1 = arith.constant 0 : i32
    return %c0_i32, %c0_i32_0 : i32, i32
  }
  func.func @transform_6(%arg0: i32) -> (i32, i32) {
    %c0_i32 = arith.constant 0 : i32
    %c0_i32_0 = arith.constant 0 : i32
    %c0_i32_1 = arith.constant 0 : i32
    return %c0_i32, %c0_i32_0 : i32, i32
  }
  func.func @transform_7(%arg0: i32) -> (i32, i32) {
    %c0_i32 = arith.constant 0 : i32
    %c0_i32_0 = arith.constant 0 : i32
    return %arg0, %c0_i32 : i32, i32
  }
}

</mosaic_0001>

<llo_original>
// kernel: dqn_forward.1
$region0: #{dqn_forward.1}
  #allocation0 [shape = 'u32[]', space=smem, size = 0x4, offset = 0x4, fixed_abs, tag = 'smem constant byte address 0x4 - core index']
  #allocation1 [shape = 'u32[144,128]{1,0:T(1,128)}', space=vmem, size = 0x12000, scoped, tag = 'internal scratch']
  %s0 = inlined_call_operand.vmem [shape: f32[8,16], index: 0, kind: input, shape index: {}]
  %s1 = inlined_call_operand.hbm [shape: bf16[16,128], index: 1, kind: input, shape index: {}]
  %s2 = inlined_call_operand.vmem [shape: f32[1,128], index: 2, kind: input, shape index: {}]
  %s3 = inlined_call_operand.vmem [shape: bf16[128,128], index: 3, kind: input, shape index: {}]
  %s4 = inlined_call_operand.vmem [shape: f32[1,128], index: 4, kind: input, shape index: {}]
  %s5 = inlined_call_operand.vmem [shape: bf16[128,4], index: 5, kind: input, shape index: {}]
  %s6 = inlined_call_operand.vmem [shape: f32[1,4], index: 6, kind: input, shape index: {}]
  %s7 = inlined_call_operand.vmem [shape: f32[8,4], index: 7, kind: output, shape index: {}]
  %s8 = sld [smem:[#allocation0]]
  $region42: #{dqn_forward.1} parent=0
    _
  %s10 = ssub.s32 1, %s8
  %s11 = scalar_select 0, %s10, %s8
  $region1: #{dqn_forward.1} parent=0
    #allocation2 [shape = 'u8[4096]{0}', space=vmem, size = 0x1000, scoped, tag = 'input window, operand 1, single buffered']
    #allocation3 [shape = 's32[1]{0}', space=sflag, size = 0x4, scoped, tag = 'scoped memory for dqn_forward.1']
    %12 = vsyncpa [#allocation3], 0
    // Predicated region
    $region2: #{dqn_forward.1} parent=1 // pred_check
      _
    $region3: #{dqn_forward.1} parent=1 // pred_check_branch
      %14 = sbr.rel (0) target = $region5
    $region4: #{dqn_forward.1} parent=1 // pred_region
      _
    $region5: #{dqn_forward.1} parent=1 // pred_fallthru
      _
    // Predicated region
    $region6: #{dqn_forward.1} parent=1 // pred_check
      _
    $region7: #{dqn_forward.1} parent=1 // pred_check_branch
      %16 = sbr.rel (0) target = $region9
    $region8: #{dqn_forward.1} parent=1 // pred_region
      %s18 = ssub.s32 128, 128
      %19 = vsyncadd [#allocation3], %s18
      %s20 = sshll.u32 [#allocation2], 4
      %s21 = int_to_ptr.vmem [resolvable:$true] %s20
      %26 = dma.hbm_to_vmem [thread:$0]  %s1, 128, %s21, [#allocation3], 64, 64, 4
    $region9: #{dqn_forward.1} parent=1 // pred_fallthru
      _
    // Predicated region
    $region10: #{dqn_forward.1} parent=1 // pred_check
      _
    $region11: #{dqn_forward.1} parent=1 // pred_check_branch
      %28 = sbr.rel (0) target = $region13
    $region12: #{dqn_forward.1} parent=1 // pred_region
      _
    $region13: #{dqn_forward.1} parent=1 // pred_fallthru
      _
    // Predicated region
    $region14: #{dqn_forward.1} parent=1 // pred_check
      _
    $region15: #{dqn_forward.1} parent=1 // pred_check_branch
      %30 = sbr.rel (0) target = $region17
    $region16: #{dqn_forward.1} parent=1 // pred_region
      _
    $region17: #{dqn_forward.1} parent=1 // pred_fallthru
      _
    // Predicated region
    $region18: #{dqn_forward.1} parent=1 // pred_check
      _
    $region19: #{dqn_forward.1} parent=1 // pred_check_branch
      %32 = sbr.rel (0) target = $region21
    $region20: #{dqn_forward.1} parent=1 // pred_region
      _
    $region21: #{dqn_forward.1} parent=1 // pred_fallthru
      _
    // Predicated region
    $region22: #{dqn_forward.1} parent=1 // pred_check
      _
    $region23: #{dqn_forward.1} parent=1 // pred_check_branch
      %34 = sbr.rel (0) target = $region25
    $region24: #{dqn_forward.1} parent=1 // pred_region
      _
    $region25: #{dqn_forward.1} parent=1 // pred_fallthru
      _
    // Predicated region
    $region26: #{dqn_forward.1} parent=1 // pred_check
      _
    $region27: #{dqn_forward.1} parent=1 // pred_check_branch
      %36 = sbr.rel (0) target = $region29
    $region28: #{dqn_forward.1} parent=1 // pred_region
      _
    $region29: #{dqn_forward.1} parent=1 // pred_fallthru
      _
    // Predicated region
    $region30: #{dqn_forward.1} parent=1 // pred_check
      _
    $region31: #{dqn_forward.1} parent=1 // pred_check_branch
      %38 = sbr.rel (0) target = $region33
    $region32: #{dqn_forward.1} parent=1 // pred_region
      %39 = dma.done [#allocation3], 128
    $region33: #{dqn_forward.1} parent=1 // pred_fallthru
      _
    %v41 = vld [vmem:[%s0] sm:$0xff]
    %v42 = vpack.c.bf16 %v41, %v41
    %v43 = vld [vmem:[#allocation2] sm:$0xf]
    %v44 = vld [vmem:[#allocation2 + $0x4] sm:$0xf]
    %v45 = vld [vmem:[%s2] sm:$0x1]
    %v47 = vlaneseq
    %v48 = vshrl.u32 %v47, 7
    %v49 = vsub.s32 0, %v48
    %v50 = vrot.slane %v45, %v49
    %v54 = vunpack.c.l.b16 %v43
    %v55 = vunpack.c.l.b16 %v44
    %v56 = vpack.c.b16 %v55, %v54
    %vm58 = vcmask 130048
    %v60 = vsel %vm58, %v42, 0
    %62 = vmatprep.subr.bf16.mxu0 0
    %63 = vmatpush1.bf16.msra.mxu0 %v56
    %64 = vmatprep.subr.bf16.mxu0 0
    %65 = vmatpush1.bf16.msra.mxu0 0
    %66 = vmatprep.subr.bf16.mxu0 0
    %67 = vmatpush1.bf16.msra.mxu0 0
    %68 = vmatprep.subr.bf16.mxu0 0
    %69 = vmatpush1.bf16.msra.mxu0 0
    %70 = vmatprep.subr.bf16.mxu0 0
    %71 = vmatpush1.bf16.msra.mxu0 0
    %72 = vmatprep.subr.bf16.mxu0 0
    %73 = vmatpush1.bf16.msra.mxu0 0
    %74 = vmatprep.subr.bf16.mxu0 0
    %75 = vmatpush1.bf16.msra.mxu0 0
    %76 = vmatprep.subr.bf16.mxu0 0
    %77 = vmatpush1.bf16.msra.mxu0 0
    %78 = vmatprep.subr.bf16.mxu0 0
    %79 = vmatpush1.bf16.msra.mxu0 0
    %80 = vmatprep.subr.bf16.mxu0 0
    %81 = vmatpush1.bf16.msra.mxu0 0
    %82 = vmatprep.subr.bf16.mxu0 0
    %83 = vmatpush1.bf16.msra.mxu0 0
    %84 = vmatprep.subr.bf16.mxu0 0
    %85 = vmatpush1.bf16.msra.mxu0 0
    %86 = vmatprep.subr.bf16.mxu0 0
    %87 = vmatpush1.bf16.msra.mxu0 0
    %88 = vmatprep.subr.bf16.mxu0 0
    %89 = vmatpush1.bf16.msra.mxu0 0
    %90 = vmatprep.subr.bf16.mxu0 0
    %91 = vmatpush1.bf16.msra.mxu0 0
    %92 = vmatprep.subr.bf16.mxu0 0
    %93 = vmatpush1.bf16.msra.mxu0 0
    %94 = vmatprep.mubr.bf16.mxu0 0
    %95 = vmatmul.mubr.bf16.gmra.mrb[0].mxu0 %v60
    %v96 = vpop.f32.mrb[0].mxu0
    %v97 = vadd.f32 %v50, %v96
    %v98 = vpop.f32.mrb[0].mxu0
    %v99 = vpop.f32.mrb[0].mxu0
    %v100 = vpop.f32.mrb[0].mxu0
    %101 = vdwg.mxu0
    %v102 = vmax.f32 %v97, 0.0
    %v103 = vpack.c.bf16 %v102, %v102
    %v104 = vld [vmem:[%s3] sm:$0xf]
    %v105 = vld [vmem:[%s3 + $0x4] sm:$0xf]
    %v106 = vld [vmem:[%s3 + $0x8] sm:$0xf]
    %v107 = vld [vmem:[%s3 + $0xc] sm:$0xf]
    %v108 = vld [vmem:[%s3 + $0x10] sm:$0xf]
    %v109 = vld [vmem:[%s3 + $0x14] sm:$0xf]
    %v110 = vld [vmem:[%s3 + $0x18] sm:$0xf]
    %v111 = vld [vmem:[%s3 + $0x1c] sm:$0xf]
    %v112 = vld [vmem:[%s3 + $0x20] sm:$0xf]
    %v113 = vld [vmem:[%s3 + $0x24] sm:$0xf]
    %v114 = vld [vmem:[%s3 + $0x28] sm:$0xf]
    %v115 = vld [vmem:[%s3 + $0x2c] sm:$0xf]
    %v116 = vld [vmem:[%s3 + $0x30] sm:$0xf]
    %v117 = vld [vmem:[%s3 + $0x34] sm:$0xf]
    %v118 = vld [vmem:[%s3 + $0x38] sm:$0xf]
    %v119 = vld [vmem:[%s3 + $0x3c] sm:$0xf]
    %v120 = vld [vmem:[%s4] sm:$0x1]
    %v122 = vlaneseq
    %v123 = vshrl.u32 %v122, 7
    %v124 = vsub.s32 0, %v123
    %v125 = vrot.slane %v120, %v124
    %v143 = vunpack.c.l.b16 %v104
    %v144 = vunpack.c.l.b16 %v105
    %v145 = vunpack.c.l.b16 %v106
    %v146 = vunpack.c.l.b16 %v107
    %v147 = vunpack.c.l.b16 %v108
    %v148 = vunpack.c.l.b16 %v109
    %v149 = vunpack.c.l.b16 %v110
    %v150 = vunpack.c.l.b16 %v111
    %v151 = vunpack.c.l.b16 %v112
    %v152 = vunpack.c.l.b16 %v113
    %v153 = vunpack.c.l.b16 %v114
    %v154 = vunpack.c.l.b16 %v115
    %v155 = vunpack.c.l.b16 %v116
    %v156 = vunpack.c.l.b16 %v117
    %v157 = vunpack.c.l.b16 %v118
    %v158 = vunpack.c.l.b16 %v119
    %v159 = vpack.c.b16 %v144, %v143
    %v160 = vpack.c.b16 %v146, %v145
    %v161 = vpack.c.b16 %v148, %v147
    %v162 = vpack.c.b16 %v150, %v149
    %v163 = vpack.c.b16 %v152, %v151
    %v164 = vpack.c.b16 %v154, %v153
    %v165 = vpack.c.b16 %v156, %v155
    %v166 = vpack.c.b16 %v158, %v157
    %175 = vmatprep.subr.bf16.mxu0 0
    %176 = vmatpush1.bf16.msra.mxu0 %v159
    %177 = vmatprep.subr.bf16.mxu0 0
    %178 = vmatpush1.bf16.msra.mxu0 %v160
    %179 = vmatprep.subr.bf16.mxu0 0
    %180 = vmatpush1.bf16.msra.mxu0 %v161
    %181 = vmatprep.subr.bf16.mxu0 0
    %182 = vmatpush1.bf16.msra.mxu0 %v162
    %183 = vmatprep.subr.bf16.mxu0 0
    %184 = vmatpush1.bf16.msra.mxu0 %v163
    %185 = vmatprep.subr.bf16.mxu0 0
    %186 = vmatpush1.bf16.msra.mxu0 %v164
    %187 = vmatprep.subr.bf16.mxu0 0
    %188 = vmatpush1.bf16.msra.mxu0 %v165
    %189 = vmatprep.subr.bf16.mxu0 0
    %190 = vmatpush1.bf16.msra.mxu0 %v166
    %191 = vmatprep.subr.bf16.mxu0 0
    %192 = vmatpush1.bf16.msra.mxu0 0
    %193 = vmatprep.subr.bf16.mxu0 0
    %194 = vmatpush1.bf16.msra.mxu0 0
    %195 = vmatprep.subr.bf16.mxu0 0
    %196 = vmatpush1.bf16.msra.mxu0 0
    %197 = vmatprep.subr.bf16.mxu0 0
    %198 = vmatpush1.bf16.msra.mxu0 0
    %199 = vmatprep.subr.bf16.mxu0 0
    %200 = vmatpush1.bf16.msra.mxu0 0
    %201 = vmatprep.subr.bf16.mxu0 0
    %202 = vmatpush1.bf16.msra.mxu0 0
    %203 = vmatprep.subr.bf16.mxu0 0
    %204 = vmatpush1.bf16.msra.mxu0 0
    %205 = vmatprep.subr.bf16.mxu0 0
    %206 = vmatpush1.bf16.msra.mxu0 0
    %207 = vmatprep.mubr.bf16.mxu0 0
    %208 = vmatmul.mubr.bf16.gmra.mrb[0].mxu0 %v103
    %v209 = vpop.f32.mrb[0].mxu0
    %v210 = vadd.f32 %v125, %v209
    %v211 = vpop.f32.mrb[0].mxu0
    %v212 = vpop.f32.mrb[0].mxu0
    %v213 = vpop.f32.mrb[0].mxu0
    %214 = vdwg.mxu0
    %v215 = vmax.f32 %v210, 0.0
    %v216 = vpack.c.bf16 %v215, %v215
    %v217 = vld [vmem:[%s5] sm:$0xf]
    %v218 = vld [vmem:[%s5 + $0x4] sm:$0xf]
    %v219 = vld [vmem:[%s5 + $0x8] sm:$0xf]
    %v220 = vld [vmem:[%s5 + $0xc] sm:$0xf]
    %v221 = vld [vmem:[%s5 + $0x10] sm:$0xf]
    %v222 = vld [vmem:[%s5 + $0x14] sm:$0xf]
    %v223 = vld [vmem:[%s5 + $0x18] sm:$0xf]
    %v224 = vld [vmem:[%s5 + $0x1c] sm:$0xf]
    %v225 = vld [vmem:[%s5 + $0x20] sm:$0xf]
    %v226 = vld [vmem:[%s5 + $0x24] sm:$0xf]
    %v227 = vld [vmem:[%s5 + $0x28] sm:$0xf]
    %v228 = vld [vmem:[%s5 + $0x2c] sm:$0xf]
    %v229 = vld [vmem:[%s5 + $0x30] sm:$0xf]
    %v230 = vld [vmem:[%s5 + $0x34] sm:$0xf]
    %v231 = vld [vmem:[%s5 + $0x38] sm:$0xf]
    %v232 = vld [vmem:[%s5 + $0x3c] sm:$0xf]
    %v233 = vld [vmem:[%s6] sm:$0x1]
    %v235 = vlaneseq
    %v236 = vshrl.u32 %v235, 7
    %v237 = vsub.s32 0, %v236
    %v238 = vrot.slane %v233, %v237
    %v256 = vunpack.c.l.b16 %v217
    %v257 = vunpack.c.l.b16 %v218
    %v258 = vunpack.c.l.b16 %v219
    %v259 = vunpack.c.l.b16 %v220
    %v260 = vunpack.c.l.b16 %v221
    %v261 = vunpack.c.l.b16 %v222
    %v262 = vunpack.c.l.b16 %v223
    %v263 = vunpack.c.l.b16 %v224
    %v264 = vunpack.c.l.b16 %v225
    %v265 = vunpack.c.l.b16 %v226
    %v266 = vunpack.c.l.b16 %v227
    %v267 = vunpack.c.l.b16 %v228
    %v268 = vunpack.c.l.b16 %v229
    %v269 = vunpack.c.l.b16 %v230
    %v270 = vunpack.c.l.b16 %v231
    %v271 = vunpack.c.l.b16 %v232
    %v272 = vpack.c.b16 %v257, %v256
    %v273 = vpack.c.b16 %v259, %v258
    %v274 = vpack.c.b16 %v261, %v260
    %v275 = vpack.c.b16 %v263, %v262
    %v276 = vpack.c.b16 %v265, %v264
    %v277 = vpack.c.b16 %v267, %v266
    %v278 = vpack.c.b16 %v269, %v268
    %v279 = vpack.c.b16 %v271, %v270
    %288 = vmatprep.subr.bf16.mxu0 0
    %289 = vmatpush1.bf16.msra.mxu0 %v272
    %290 = vmatprep.subr.bf16.mxu0 0
    %291 = vmatpush1.bf16.msra.mxu0 %v273
    %292 = vmatprep.subr.bf16.mxu0 0
    %293 = vmatpush1.bf16.msra.mxu0 %v274
    %294 = vmatprep.subr.bf16.mxu0 0
    %295 = vmatpush1.bf16.msra.mxu0 %v275
    %296 = vmatprep.subr.bf16.mxu0 0
    %297 = vmatpush1.bf16.msra.mxu0 %v276
    %298 = vmatprep.subr.bf16.mxu0 0
    %299 = vmatpush1.bf16.msra.mxu0 %v277
    %300 = vmatprep.subr.bf16.mxu0 0
    %301 = vmatpush1.bf16.msra.mxu0 %v278
    %302 = vmatprep.subr.bf16.mxu0 0
    %303 = vmatpush1.bf16.msra.mxu0 %v279
    %304 = vmatprep.subr.bf16.mxu0 0
    %305 = vmatpush1.bf16.msra.mxu0 0
    %306 = vmatprep.subr.bf16.mxu0 0
    %307 = vmatpush1.bf16.msra.mxu0 0
    %308 = vmatprep.subr.bf16.mxu0 0
    %309 = vmatpush1.bf16.msra.mxu0 0
    %310 = vmatprep.subr.bf16.mxu0 0
    %311 = vmatpush1.bf16.msra.mxu0 0
    %312 = vmatprep.subr.bf16.mxu0 0
    %313 = vmatpush1.bf16.msra.mxu0 0
    %314 = vmatprep.subr.bf16.mxu0 0
    %315 = vmatpush1.bf16.msra.mxu0 0
    %316 = vmatprep.subr.bf16.mxu0 0
    %317 = vmatpush1.bf16.msra.mxu0 0
    %318 = vmatprep.subr.bf16.mxu0 0
    %319 = vmatpush1.bf16.msra.mxu0 0
    %320 = vmatprep.mubr.bf16.mxu0 0
    %321 = vmatmul.mubr.bf16.gmra.mrb[0].mxu0 %v216
    %v322 = vpop.f32.mrb[0].mxu0
    %v323 = vadd.f32 %v238, %v322
    %v324 = vpop.f32.mrb[0].mxu0
    %v325 = vpop.f32.mrb[0].mxu0
    %v326 = vpop.f32.mrb[0].mxu0
    %327 = vdwg.mxu0
    %vm328 = vcmask 31744
    %329 = vst.msk [vmem:[%s7] sm:$0xff] %vm328, %v323
    // Predicated region
    $region34: #{dqn_forward.1} parent=1 // pred_check
      _
    $region35: #{dqn_forward.1} parent=1 // pred_check_branch
      %331 = sbr.rel (0) target = $region37
    $region36: #{dqn_forward.1} parent=1 // pred_region
      _
    $region37: #{dqn_forward.1} parent=1 // pred_fallthru
      _
    // Predicated region
    $region38: #{dqn_forward.1} parent=1 // pred_check
      _
    $region39: #{dqn_forward.1} parent=1 // pred_check_branch
      %333 = sbr.rel (0) target = $region41
    $region40: #{dqn_forward.1} parent=1 // pred_region
      _
    $region41: #{dqn_forward.1} parent=1 // pred_fallthru
      _
    %334 = vsyncpa [#allocation3], 1

</llo_original>
